<compile_context>
chip_gen: v7x
topology: tpu7x:2x2x1
jax: 0.10.0
libtpu: 0.0.40
codegen_flags: <defaults>
</compile_context>

<pallas_src>
import functools
import math

import jax
import jax.numpy as jnp
from jax.experimental import pallas as pl
from jax.experimental.pallas import tpu as pltpu


_VMEM_HEADROOM = 0.7  # leave ~30% of the scoped limit for Mosaic internals


def _vmem_limit_bytes():
    """Per-generation scoped-VMEM limit: ~62% of physical, capped at 96 MiB."""
    phys = None
    try:
        info = pltpu.get_tpu_info()
        phys = getattr(info, "vmem_capacity_bytes", None)
    except Exception:
        phys = None
    if not phys:
        return 32 << 20  # conservative fallback (safe on v5e/v6e/v7x)
    # 128 MiB physical (v5e/v6e) -> 80 MiB; 64 MiB physical (v7x) -> 40 MiB
    return min(96 << 20, int(phys * 0.625))


def _choose_batch_tile(B, step_bytes_per_tb, budget):
    """Largest batch tile that fits the budget, keeping >= 2 grid steps (prefer even)."""
    max_tb = min(B, max(1, budget // max(1, step_bytes_per_tb)))
    if B >= 2:
        # keep >= 2 grid steps so both v7x TensorCores get work
        max_tb = min(max_tb, pl.cdiv(B, 2))
    nsteps = pl.cdiv(B, max_tb)
    if nsteps > 1 and nsteps % 2 == 1:
        # mild preference for an even step count (v7x core balance),
        # without shrinking the tile by more than ~1/3
        for tb in range(max_tb - 1, max(0, (2 * max_tb) // 3), -1):
            if pl.cdiv(B, tb) % 2 == 0:
                return tb
    return max_tb


# ---------------------------------------------------------------------------
# Single-pass kernel: one (TB, C, HW) tile per grid step.
# ---------------------------------------------------------------------------
def _eca_kernel(x_ref, wt_ref, b_ref, o_ref, *, inv_hw):
    """
    x_ref : (TB, C, HW) input tile (full C, HW dims -> exempt from (8,128) rule)
    wt_ref: (C, C)      Conv1d center tap, transposed to (in, out), f32
    b_ref : (1, C)      Conv1d bias, f32
    o_ref : (TB, C, HW) output tile
    """
    x = x_ref[...]
    # AdaptiveAvgPool2d(1): spatial mean per channel, f32 accumulation without
    # materializing a full-tile f32 upcast.
    pooled = jnp.sum(x, axis=-1, dtype=jnp.float32) * inv_hw                 # (TB, C)
    # Conv1d on a length-1 signal == matmul with the kernel's center tap + bias.
    att = jnp.dot(pooled, wt_ref[...],
                  preferred_element_type=jnp.float32) + b_ref[...]           # (TB, C)
    att = jax.nn.sigmoid(att)
    # Channel-wise rescale in the input dtype (no f32 upcast of the whole tile).
    o_ref[...] = x * att.astype(x.dtype)[:, :, None]


# ---------------------------------------------------------------------------
# Two-pass fallback (big slabs): pass 1 pooling, pass 2 scaling.
# ---------------------------------------------------------------------------
def _pool_kernel(x_ref, sum_ref, *, hw, thw):
    """Accumulate per-channel spatial sums over HW chunks of size thw."""
    h = pl.program_id(1)

    @pl.when(h == 0)
    def _():
        sum_ref[...] = jnp.zeros_like(sum_ref)

    x = x_ref[...]
    # Edge chunk: lanes past the true HW hold stale data -> mask before summing.
    lane = jax.lax.broadcasted_iota(jnp.int32, x.shape, 2)
    valid = (lane + h * thw) < hw
    xm = jnp.where(valid, x, jnp.zeros_like(x))
    sum_ref[...] += jnp.sum(xm, axis=-1, keepdims=True, dtype=jnp.float32)


def _scale_kernel(x_ref, att_ref, o_ref):
    """Chunk-wise channel rescale: out = x * att (att is (TB, C, 1))."""
    x = x_ref[...]
    o_ref[...] = x * att_ref[...].astype(x.dtype)


def _eca_two_pass(x_flat, w_t, bias2d, hw, thw, vmem_limit):
    B, C, _ = x_flat.shape
    nhw = pl.cdiv(hw, thw)

    sums = pl.pallas_call(
        functools.partial(_pool_kernel, hw=hw, thw=thw),
        out_shape=jax.ShapeDtypeStruct((B, C, 1), jnp.float32),
        grid_spec=pltpu.PrefetchScalarGridSpec(
            num_scalar_prefetch=0,
            grid=(B, nhw),
            in_specs=[pl.BlockSpec((1, C, thw), lambda b, h: (b, 0, h))],
            out_specs=pl.BlockSpec((1, C, 1), lambda b, h: (b, 0, 0)),
        ),
        compiler_params=pltpu.CompilerParams(
            dimension_semantics=("parallel", "arbitrary"),
            vmem_limit_bytes=vmem_limit,
        ),
    )(x_flat)

    pooled = sums[:, :, 0] * (1.0 / hw)                       # (B, C) f32
    att = jax.nn.sigmoid(pooled @ w_t + bias2d)               # tiny; plain XLA
    att3 = att[:, :, None]                                    # (B, C, 1) f32

    out_flat = pl.pallas_call(
        _scale_kernel,
        out_shape=jax.ShapeDtypeStruct(x_flat.shape, x_flat.dtype),
        grid_spec=pltpu.PrefetchScalarGridSpec(
            num_scalar_prefetch=0,
            grid=(B, nhw),
            in_specs=[
                pl.BlockSpec((1, C, thw), lambda b, h: (b, 0, h)),
                pl.BlockSpec((1, C, 1), lambda b, h: (b, 0, 0)),
            ],
            out_specs=pl.BlockSpec((1, C, thw), lambda b, h: (b, 0, h)),
        ),
        compiler_params=pltpu.CompilerParams(
            dimension_semantics=("parallel", "parallel"),
            vmem_limit_bytes=vmem_limit,
        ),
    )(x_flat, att3)
    return out_flat


# ---------------------------------------------------------------------------
# Public wrapper.
# ---------------------------------------------------------------------------
def eca_forward(x, weight, bias, kernel_size, *, two_pass=None, hw_chunk=None):
    """ECA forward. x: (B, C, H, W); weight: (C, C, k) Conv1d weight; bias: (C,)."""
    B, C, H, W = x.shape
    HW = H * W
    dtype_bytes = jnp.dtype(x.dtype).itemsize

    # Only the center tap of the Conv1d kernel ever sees the length-1 pooled signal.
    w_t = weight[:, :, kernel_size // 2].T.astype(jnp.float32)   # (C_in, C_out)
    bias2d = bias.reshape(1, C).astype(jnp.float32)
    x_flat = x.reshape(B, C, HW)                                  # no padding / no slicing

    vmem_limit = _vmem_limit_bytes()
    budget = int(vmem_limit * _VMEM_HEADROOM)

    per_batch = C * HW * dtype_bytes
    step_bytes_per_tb = 4 * per_batch        # double-buffered input + output tiles
    if dtype_bytes < 4:
        step_bytes_per_tb += C * HW * 4      # charge a possible f32 temp while pooling

    if two_pass is None:
        two_pass = (step_bytes_per_tb > budget) and (HW >= 256)

    if two_pass:
        if hw_chunk is None:
            hw_chunk = max(128, (budget // (8 * C * max(dtype_bytes, 4))) // 128 * 128)
            hw_chunk = min(hw_chunk, max(128, (HW // 128) * 128))
        out_flat = _eca_two_pass(x_flat, w_t, bias2d, HW, hw_chunk, vmem_limit)
        return out_flat.reshape(B, C, H, W)

    TB = _choose_batch_tile(B, step_bytes_per_tb, budget)
    grid = (pl.cdiv(B, TB),)

    cost = pl.CostEstimate(
        flops=int(2 * B * C * HW + 2 * B * C * C),
        transcendentals=int(B * C),
        bytes_accessed=int(2 * B * C * HW * dtype_bytes + C * C * 4 + C * 4),
    )

    out_flat = pl.pallas_call(
        functools.partial(_eca_kernel, inv_hw=1.0 / HW),
        out_shape=jax.ShapeDtypeStruct((B, C, HW), x.dtype),
        grid_spec=pltpu.PrefetchScalarGridSpec(
            num_scalar_prefetch=0,
            grid=grid,
            in_specs=[
                pl.BlockSpec((TB, C, HW), lambda b: (b, 0, 0)),
                pl.BlockSpec((C, C), lambda b: (0, 0)),     # resident across steps
                pl.BlockSpec((1, C), lambda b: (0, 0)),     # resident across steps
            ],
            out_specs=pl.BlockSpec((TB, C, HW), lambda b: (b, 0, 0)),
        ),
        compiler_params=pltpu.CompilerParams(
            dimension_semantics=("parallel",),
            vmem_limit_bytes=vmem_limit,
        ),
        cost_estimate=cost,
    )(x_flat, w_t, bias2d)

    return out_flat.reshape(B, C, H, W)


def _reference(x, weight, bias, kernel_size):
    """Pure-JAX reference of the exact PyTorch forward (for validation)."""
    pooled = jnp.mean(x.astype(jnp.float32), axis=(2, 3))          # (B, C)
    w_center = weight[:, :, kernel_size // 2].astype(jnp.float32)  # (C_out, C_in)
    att = pooled @ w_center.T + bias.astype(jnp.float32)           # (B, C)
    att = jax.nn.sigmoid(att).astype(x.dtype)
    return x * att[:, :, None, None]


if __name__ == "__main__":
    # Module config (matches _EfficientChannelAttentionModule(channels=16))
    channels, gamma, b_hp = 16, 2, 1
    t = int(abs((math.log(channels, 2) + b_hp) / gamma))
    kernel_size = t if t % 2 else t + 1                            # -> 3 for channels=16

    key = jax.random.PRNGKey(0)
    fan_in = channels * kernel_size
    bound = 1.0 / math.sqrt(fan_in)

    # (shape, dtype, force_two_pass, hw_chunk)
    cases = [
        ((2, channels, 16, 16), jnp.float32, None, None),   # HW multiple of 128
        ((2, channels, 14, 14), jnp.float32, None, None),   # HW=196 (no wrapper pad/slice)
        ((3, channels, 14, 14), jnp.float32, None, None),   # non-divisor batch tile (cdiv grid)
        ((2, channels, 20, 20), jnp.float32, True, 128),    # forced two-pass, edge-chunk masking
        ((2, channels, 16, 16), jnp.bfloat16, None, None),  # bf16 path (f32-accumulated pooling)
    ]

    for shape, dtype, force_two_pass, hw_chunk in cases:
        key, kx, kw, kb = jax.random.split(key, 4)
        B, C, H, W = shape
        x = jax.random.normal(kx, shape, dtype=jnp.float32).astype(dtype)
        weight = jax.random.uniform(kw, (C, C, kernel_size),
                                    minval=-bound, maxval=bound, dtype=jnp.float32)
        bias = jax.random.uniform(kb, (C,), minval=-bound, maxval=bound,
                                  dtype=jnp.float32)

        out = jax.block_until_ready(
            eca_forward(x, weight, bias, kernel_size,
                        two_pass=force_two_pass, hw_chunk=hw_chunk))
        ref = _reference(x, weight, bias, kernel_size)
        assert out.shape == shape
        tol = 1e-5 if dtype == jnp.float32 else 2e-2
        assert jnp.allclose(out.astype(jnp.float32), ref.astype(jnp.float32),
                            atol=tol, rtol=tol), f"mismatch for {shape} {dtype}"

    print("KERNEL_OK")
</pallas_src>

<mosaic_0001>
module attributes {stable_mosaic.version = 11 : i64} {
  func.func @_eca_kernel(%arg0: i32, %arg1: memref<1x16x256xf32, #tpu.memory_space<vmem>>, %arg2: memref<16x16xf32, #tpu.memory_space<vmem>>, %arg3: memref<1x16xf32, #tpu.memory_space<vmem>>, %arg4: memref<1x16x256xf32, #tpu.memory_space<vmem>>) attributes {dimension_semantics = [#tpu.dimension_semantics<parallel>], iteration_bounds = array<i64: 2>, scalar_prefetch = 0 : i64, scratch_operands = 0 : i64, tpu.core_type = #tpu.core_type<tc>, window_params = [{transform_indices = @transform_0, window_bounds = array<i64: 1, 16, 256>}, {pipeline_mode = #tpu.pipeline_mode<synchronous>, transform_indices = @transform_1, window_bounds = array<i64: 16, 16>}, {pipeline_mode = #tpu.pipeline_mode<synchronous>, transform_indices = @transform_2, window_bounds = array<i64: 1, 16>}, {transform_indices = @transform_3, window_bounds = array<i64: 1, 16, 256>}]} {
    %c0 = arith.constant 0 : index
    %c0_0 = arith.constant 0 : index
    %c0_1 = arith.constant 0 : index
    %0 = vector.load %arg1[%c0, %c0_0, %c0_1] : memref<1x16x256xf32, #tpu.memory_space<vmem>>, vector<1x16x256xf32>
    %cst = arith.constant dense<0.000000e+00> : vector<1x16xf32>
    %1 = vector.multi_reduction <add>, %0, %cst [2] : vector<1x16x256xf32> to vector<1x16xf32>
    %cst_2 = arith.constant 3.906250e-03 : f32
    %2 = vector.broadcast %cst_2 : f32 to vector<1x16xf32>
    %3 = arith.mulf %1, %2 : vector<1x16xf32>
    %c0_3 = arith.constant 0 : index
    %c0_4 = arith.constant 0 : index
    %4 = vector.load %arg2[%c0_3, %c0_4] : memref<16x16xf32, #tpu.memory_space<vmem>>, vector<16x16xf32>
    %cst_5 = arith.constant dense<0.000000e+00> : vector<1x16xf32>
    %5 = tpu.matmul %3, %4, %cst_5 {dimension_numbers = #tpu.dot_dimension_numbers<[1], [0], [0], [1], [0, 0, 1, 1], [], []>} : vector<1x16xf32>, vector<16x16xf32>, vector<1x16xf32> -> vector<1x16xf32>
    %c0_6 = arith.constant 0 : index
    %c0_7 = arith.constant 0 : index
    %6 = vector.load %arg3[%c0_6, %c0_7] : memref<1x16xf32, #tpu.memory_space<vmem>>, vector<1x16xf32>
    %7 = arith.addf %5, %6 : vector<1x16xf32>
    %8 = arith.negf %7 : vector<1x16xf32>
    %9 = math.exp %8 : vector<1x16xf32>
    %cst_8 = arith.constant 1.000000e+00 : f32
    %10 = vector.broadcast %cst_8 : f32 to vector<1x16xf32>
    %11 = arith.addf %10, %9 : vector<1x16xf32>
    %12 = arith.divf %10, %11 : vector<1x16xf32>
    %13 = vector.shape_cast %12 : vector<1x16xf32> to vector<1x16x1xf32>
    %14 = vector.broadcast %13 : vector<1x16x1xf32> to vector<1x16x256xf32>
    %15 = arith.mulf %0, %14 : vector<1x16x256xf32>
    %c0_9 = arith.constant 0 : index
    %c0_10 = arith.constant 0 : index
    %c0_11 = arith.constant 0 : index
    %16 = vector.load %arg4[%c0_9, %c0_10, %c0_11] : memref<1x16x256xf32, #tpu.memory_space<vmem>>, vector<1x16x256xf32>
    tpu.vector_store %arg4[%c0_9, %c0_10, %c0_11], %15 {strides = array<i32>} : memref<1x16x256xf32, #tpu.memory_space<vmem>>, vector<1x16x256xf32>,
    return
  }
  func.func @transform_0(%arg0: i32) -> (i32, i32, i32) {
    %c0_i32 = arith.constant 0 : i32
    %c0_i32_0 = arith.constant 0 : i32
    %c0_i32_1 = arith.constant 0 : i32
    return %arg0, %c0_i32, %c0_i32_0 : i32, i32, i32
  }
  func.func @transform_1(%arg0: i32) -> (i32, i32) {
    %c0_i32 = arith.constant 0 : i32
    %c0_i32_0 = arith.constant 0 : i32
    %c0_i32_1 = arith.constant 0 : i32
    return %c0_i32, %c0_i32_0 : i32, i32
  }
  func.func @transform_2(%arg0: i32) -> (i32, i32) {
    %c0_i32 = arith.constant 0 : i32
    %c0_i32_0 = arith.constant 0 : i32
    %c0_i32_1 = arith.constant 0 : i32
    return %c0_i32, %c0_i32_0 : i32, i32
  }
  func.func @transform_3(%arg0: i32) -> (i32, i32, i32) {
    %c0_i32 = arith.constant 0 : i32
    %c0_i32_0 = arith.constant 0 : i32
    %c0_i32_1 = arith.constant 0 : i32
    return %arg0, %c0_i32, %c0_i32_0 : i32, i32, i32
  }
}

</mosaic_0001>

<llo_original>
// kernel: tpu_custom_call.1
$region0: #{tpu_custom_call.1}
  #allocation0 [shape = 'u32[]', space=smem, size = 0x4, offset = 0x4, fixed_abs, tag = 'smem constant byte address 0x4 - core index']
  #allocation1 [shape = 'u32[144,128]{1,0:T(1,128)}', space=vmem, size = 0x12000, scoped, tag = 'internal scratch']
  %s0 = inlined_call_operand.hbm [shape: f32[2,16,256], index: 0, kind: input, shape index: {}]
  %s1 = inlined_call_operand.hbm [shape: f32[16,16], index: 1, kind: input, shape index: {}]
  %s2 = inlined_call_operand.vmem [shape: f32[1,16], index: 2, kind: input, shape index: {}]
  %s3 = inlined_call_operand.hbm [shape: f32[2,16,256], index: 3, kind: output, shape index: {}]
  %s4 = sld [smem:[#allocation0]]
  $region53: #{tpu_custom_call.1} parent=0
    _
  %s6 = ssub.s32 1, %s4
  %s7 = scalar_select 0, %s6, %s4
  $region1: #{tpu_custom_call.1} parent=0
    #allocation2 [shape = 'u8[32768]{0}', space=vmem, size = 0x8000, scoped, tag = 'input window, operand 0']
    #allocation3 [shape = 's32[2]{0}', space=sflag, size = 0x8, scoped, tag = 'scoped memory for tpu_custom_call.1']
    #allocation4 [shape = 's32[2]{0}', space=sflag, size = 0x8, scoped, tag = 'scoped memory for tpu_custom_call.1']
    #allocation5 [shape = 'u8[8192]{0}', space=vmem, size = 0x2000, scoped, tag = 'input window, operand 1, single buffered']
    #allocation6 [shape = 's32[1]{0}', space=sflag, size = 0x4, scoped, tag = 'scoped memory for tpu_custom_call.1']
    #allocation7 [shape = 'u8[32768]{0}', space=vmem, size = 0x8000, scoped, tag = 'output window, operand 0']
    %8 = vsyncpa [#allocation3], 0
    %s9 = scalar_lea.sflag [#allocation3], 1
    %10 = vsyncpa %s9, 0
    %11 = vsyncpa [#allocation6], 0
    %12 = vsyncpa [#allocation4], 0
    %s13 = scalar_lea.sflag [#allocation4], 1
    %14 = vsyncpa %s13, 0
    loop: start=0, step=1, limit=4
    $region2: #{tpu_custom_call.1} parent=1 // loop_pre_header
      _
    $region3: #{tpu_custom_call.1} parent=1 // loop_header
      %s16 = sphi 0, %s20
      %p17 = scmp.ge.s32.totalorder %s16, 4
      %s26 = sphi 0, %s28
      %s29 = sphi 0, %s26
      %s30 = sphi 0, %s29
      %s46 = sphi 0, %s30
      %s50 = sphi 0, %s50
      %s52 = sphi 0, %s50
      %s53 = sphi 0, %s52
      %s67 = sphi 0, %s53
      %s71 = sphi 0, %s71
      %s73 = sphi 0, %s71
      %s74 = sphi 0, %s73
      %s88 = sphi 0, %s74
      %s94 = sphi 0, %s96
      %s97 = sphi 0, %s94
      %s98 = sphi 0, %s97
      %s114 = sphi 0, %s98
    $region4: #{tpu_custom_call.1} parent=1 // loop_header_branch
      %19 = sbr.rel (%p17) target = $region8
    $region5: #{tpu_custom_call.1} parent=1 // loop_body
      %s21 = ssub.s32 %s16, 1
      %s22 = ssub.s32 %s16, 2
      %s23 = sadd.s32 %s16, 1
      %s24 = ssub.s32 %s16, %s23
      %p25 = scmp.eq.s32.totalorder %s24, 0
      %s27 = sadd.s32 %s26, 1
      %s28 = scalar_select %p25, %s26, %s27
      %p31 = pneg %p25
      %p32 = scmp.eq.s32.totalorder %s16, 1
      %p33 = por %p31, %p32
      %p34 = scmp.ne.s32.totalorder %s26, %s29
      %p35 = scmp.eq.s32.totalorder %s16, 0
      %p36 = por %p34, %p35
      %p37 = scmp.ne.s32.totalorder %s26, %s29
      %p38 = scmp.eq.s32.totalorder %s21, 1
      %p39 = por %p37, %p38
      %p40 = scmp.ne.s32.totalorder %s29, %s30
      %p41 = scmp.eq.s32.totalorder %s21, 0
      %p42 = por %p40, %p41
      %p43 = scmp.ne.s32.totalorder %s29, %s30
      %p44 = scmp.eq.s32.totalorder %s22, 1
      %p45 = por %p43, %p44
      %p47 = scmp.ne.s32.totalorder %s30, %s46
      %p48 = scmp.eq.s32.totalorder %s22, 0
      %p49 = por %p47, %p48
      %s51 = sadd.s32 %s50, 1
      %p54 = scmp.eq.s32.totalorder %s16, 1
      %p55 = scmp.ne.s32.totalorder %s50, %s52
      %p56 = scmp.eq.s32.totalorder %s16, 0
      %p57 = por %p55, %p56
      %p58 = scmp.ne.s32.totalorder %s50, %s52
      %p59 = scmp.eq.s32.totalorder %s21, 1
      %p60 = por %p58, %p59
      %p61 = scmp.ne.s32.totalorder %s52, %s53
      %p62 = scmp.eq.s32.totalorder %s21, 0
      %p63 = por %p61, %p62
      %p64 = scmp.ne.s32.totalorder %s52, %s53
      %p65 = scmp.eq.s32.totalorder %s22, 1
      %p66 = por %p64, %p65
      %p68 = scmp.ne.s32.totalorder %s53, %s67
      %p69 = scmp.eq.s32.totalorder %s22, 0
      %p70 = por %p68, %p69
      %s72 = sadd.s32 %s71, 1
      %p75 = scmp.eq.s32.totalorder %s16, 1
      %p76 = scmp.ne.s32.totalorder %s71, %s73
      %p77 = scmp.eq.s32.totalorder %s16, 0
      %p78 = por %p76, %p77
      %p79 = scmp.ne.s32.totalorder %s71, %s73
      %p80 = scmp.eq.s32.totalorder %s21, 1
      %p81 = por %p79, %p80
      %p82 = scmp.ne.s32.totalorder %s73, %s74
      %p83 = scmp.eq.s32.totalorder %s21, 0
      %p84 = por %p82, %p83
      %p85 = scmp.ne.s32.totalorder %s73, %s74
      %p86 = scmp.eq.s32.totalorder %s22, 1
      %p87 = por %p85, %p86
      %p89 = scmp.ne.s32.totalorder %s74, %s88
      %p90 = scmp.eq.s32.totalorder %s22, 0
      %p91 = por %p89, %p90
      %s92 = ssub.s32 %s16, %s23
      %p93 = scmp.eq.s32.totalorder %s92, 0
      %s95 = sadd.s32 %s94, 1
      %s96 = scalar_select %p93, %s94, %s95
      %p99 = pneg %p93
      %p100 = scmp.eq.s32.totalorder %s16, 1
      %p101 = por %p99, %p100
      %p102 = scmp.ne.s32.totalorder %s94, %s97
      %p103 = scmp.eq.s32.totalorder %s16, 0
      %p104 = por %p102, %p103
      %p105 = scmp.ne.s32.totalorder %s94, %s97
      %p106 = scmp.eq.s32.totalorder %s21, 1
      %p107 = por %p105, %p106
      %p108 = scmp.ne.s32.totalorder %s97, %s98
      %p109 = scmp.eq.s32.totalorder %s21, 0
      %p110 = por %p108, %p109
      %p111 = scmp.ne.s32.totalorder %s97, %s98
      %p112 = scmp.eq.s32.totalorder %s22, 1
      %p113 = por %p111, %p112
      %p115 = scmp.ne.s32.totalorder %s98, %s114
      %p116 = scmp.eq.s32.totalorder %s22, 0
      %p117 = por %p115, %p116
      %p118 = scmp.le.s32.totalorder 1, %s16
      %p119 = scmp.lt.s32.totalorder %s16, 3
      %p120 = pnand %p118, %p119
      %p121 = pneg %p120
      // Predicated region
      $region9: #{tpu_custom_call.1} parent=5 // pred_check
        _
      $region10: #{tpu_custom_call.1} parent=5 // pred_check_branch
        %123 = sbr.rel (%p120) target = $region12
      $region11: #{tpu_custom_call.1} parent=5 // pred_region
        %s124 = ssub.s32 %s16, 1
        // Predicated region
        $region13: #{tpu_custom_call.1} parent=11 // pred_check
          %p125 = pneg %p63
        $region14: #{tpu_custom_call.1} parent=11 // pred_check_branch
          %127 = sbr.rel (%p125) target = $region16
        $region15: #{tpu_custom_call.1} parent=11 // pred_region
          %s129 = ssub.s32 256, 256
          %130 = vsyncadd [#allocation6], %s129
          %s131 = sshll.u32 [#allocation5], 4
          %s132 = int_to_ptr.vmem [resolvable:$true] %s131
          %137 = dma.hbm_to_vmem [thread:$0]  %s1, 256, %s132, [#allocation6], 128, 128, 8
        $region16: #{tpu_custom_call.1} parent=11 // pred_fallthru
          _
        // Predicated region
        $region17: #{tpu_custom_call.1} parent=11 // pred_check
          %p138 = pneg %p84
        $region18: #{tpu_custom_call.1} parent=11 // pred_check_branch
          %140 = sbr.rel (%p138) target = $region20
        $region19: #{tpu_custom_call.1} parent=11 // pred_region
          _
        $region20: #{tpu_custom_call.1} parent=11 // pred_fallthru
          _
      $region12: #{tpu_custom_call.1} parent=5 // pred_fallthru
        _
      %p141 = scmp.lt.s32.totalorder %s16, 2
      // Predicated region
      $region21: #{tpu_custom_call.1} parent=5 // pred_check
        %p142 = pneg %p141
      $region22: #{tpu_custom_call.1} parent=5 // pred_check_branch
        %144 = sbr.rel (%p142) target = $region24
      $region23: #{tpu_custom_call.1} parent=5 // pred_region
        // Predicated region
        $region25: #{tpu_custom_call.1} parent=23 // pred_check
          %p145 = pneg %p36
        $region26: #{tpu_custom_call.1} parent=23 // pred_check_branch
          %147 = sbr.rel (%p145) target = $region28
        $region27: #{tpu_custom_call.1} parent=23 // pred_region
          %s148 = sand.u32 %s26, 1
          %s149 = scalar_lea.sflag [#allocation3], %s148
          %s150 = sand.u32 %s26, 1
          %s151 = smul.addr %s150, 32
          %s152 = scalar_lea.vmem [#allocation2], %s151
          %s154 = ssub.s32 512, 512
          %155 = vsyncadd %s149, %s154
          %s156 = smul.addr %s16, 4
          %s157 = smul.addr %s156, 128
          %s158 = scalar_lea.hbm %s0, %s157
          %s159 = sshll.u32 %s152, 4
          %s160 = int_to_ptr.vmem [resolvable:$true] %s159
          %165 = dma.hbm_to_vmem [thread:$0]  %s158, 512, %s160, %s149, 256, 256, 16
        $region28: #{tpu_custom_call.1} parent=23 // pred_fallthru
          _
      $region24: #{tpu_custom_call.1} parent=5 // pred_fallthru
        _
      %p166 = scmp.le.s32.totalorder 1, %s16
      %p167 = scmp.lt.s32.totalorder %s16, 3
      %p168 = pnand %p166, %p167
      %p169 = pneg %p168
      // Predicated region
      $region29: #{tpu_custom_call.1} parent=5 // pred_check
        _
      $region30: #{tpu_custom_call.1} parent=5 // pred_check_branch
        %171 = sbr.rel (%p168) target = $region32
      $region31: #{tpu_custom_call.1} parent=5 // pred_region
        %s172 = ssub.s32 %s16, 1
        %s173 = sand.u32 %s29, 1
        %s174 = scalar_lea.sflag [#allocation3], %s173
        %s175 = sand.u32 %s29, 1
        %s176 = smul.addr %s175, 32
        %s177 = scalar_lea.vmem [#allocation2], %s176
        // Predicated region
        $region33: #{tpu_custom_call.1} parent=31 // pred_check
          %p178 = pneg %p42
        $region34: #{tpu_custom_call.1} parent=31 // pred_check_branch
          %180 = sbr.rel (%p178) target = $region36
        $region35: #{tpu_custom_call.1} parent=31 // pred_region
          %181 = dma.done %s174, 512
        $region36: #{tpu_custom_call.1} parent=31 // pred_fallthru
          _
        // Predicated region
        $region37: #{tpu_custom_call.1} parent=31 // pred_check
          %p182 = pneg %p63
        $region38: #{tpu_custom_call.1} parent=31 // pred_check_branch
          %184 = sbr.rel (%p182) target = $region40
        $region39: #{tpu_custom_call.1} parent=31 // pred_region
          %185 = dma.done [#allocation6], 256
        $region40: #{tpu_custom_call.1} parent=31 // pred_fallthru
          _
        %s186 = sand.u32 %s29, 1
        %s187 = scalar_lea.sflag [#allocation3], %s186
        %s188 = sand.u32 %s29, 1
        %s189 = smul.addr %s188, 32
        %s190 = scalar_lea.vmem [#allocation2], %s189
        %p191 = pneg %p42
        %p192 = pneg %p39
        %p193 = pneg %p63
        %p194 = pneg %p60
        %p195 = pneg %p84
        %p196 = pneg %p81
        %p197 = pneg %p110
        %p198 = pneg %p107
        %s199 = sand.u32 %s97, 1
        %s200 = scalar_lea.sflag [#allocation4], %s199
        %s201 = sand.u32 %s97, 1
        %s202 = smul.addr %s201, 32
        %s203 = scalar_lea.vmem [#allocation7], %s202
        %v204 = vld [vmem:[%s177] sm:$0xff]
        %v205 = vld [vmem:[%s177 + $0x8] sm:$0xff]
        %v206 = vld [vmem:[%s177 + $0x10] sm:$0xff]
        %v207 = vld [vmem:[%s177 + $0x18] sm:$0xff]
        %v208 = vadd.f32 %v204, %v205
        %209 = vadd.xlane.f32.xlu0 %v208
        %v210 = vpop.xlane.xlu0 %209
        %v211 = vadd.f32 %v206, %v207
        %212 = vadd.xlane.f32.xlu0 %v211
        %v213 = vpop.xlane.xlu0 %212
        %v214 = vmul.f32 %v210, 0.00390625
        %v215 = vmul.f32 %v213, 0.00390625
        %v216 = vld [vmem:[#allocation5] sm:$0xff]
        %v217 = vld [vmem:[#allocation5 + $0x8] sm:$0xff]
        %v218 = vld [vmem:[%s2] sm:$0x1]
        %v221 = vlaneseq
        %v222 = vand.u32 %v221, 127
        %v223 = vlaneseq
        %v224 = vshrl.u32 %v223, 7
        %v225 = vsub.s32 %v222, %v224
        %v226 = vrot.slane %v214, %v225
        %v227 = vadd.s32 %v222, 4294967288
        %v228 = vlaneseq
        %v229 = vshrl.u32 %v228, 7
        %v230 = vsub.s32 %v227, %v229
        %v231 = vrot.slane %v215, %v230
        %vm232 = vcmask 130112
        %v233 = vsel %vm232, %v231, %v226
        %vm234 = vcmask 130048
        %v235 = vsel %vm234, %v233, 0
        %237 = vmatprep.subr.mxu0 0.0
        %238 = vmatpush1.msra.mxu0 %v216
        %239 = vmatprep.subr.mxu0 0.0
        %240 = vmatpush1.msra.mxu0 %v217
        %241 = vmatprep.subr.mxu0 0.0
        %242 = vmatpush1.msra.mxu0 0.0
        %243 = vmatprep.subr.mxu0 0.0
        %244 = vmatpush1.msra.mxu0 0.0
        %245 = vmatprep.subr.mxu0 0.0
        %246 = vmatpush1.msra.mxu0 0.0
        %247 = vmatprep.subr.mxu0 0.0
        %248 = vmatpush1.msra.mxu0 0.0
        %249 = vmatprep.subr.mxu0 0.0
        %250 = vmatpush1.msra.mxu0 0.0
        %251 = vmatprep.subr.mxu0 0.0
        %252 = vmatpush1.msra.mxu0 0.0
        %253 = vmatprep.subr.mxu0 0.0
        %254 = vmatpush1.msra.mxu0 0.0
        %255 = vmatprep.subr.mxu0 0.0
        %256 = vmatpush1.msra.mxu0 0.0
        %257 = vmatprep.subr.mxu0 0.0
        %258 = vmatpush1.msra.mxu0 0.0
        %259 = vmatprep.subr.mxu0 0.0
        %260 = vmatpush1.msra.mxu0 0.0
        %261 = vmatprep.subr.mxu0 0.0
        %262 = vmatpush1.msra.mxu0 0.0
        %263 = vmatprep.subr.mxu0 0.0
        %264 = vmatpush1.msra.mxu0 0.0
        %265 = vmatprep.subr.mxu0 0.0
        %266 = vmatpush1.msra.mxu0 0.0
        %267 = vmatprep.subr.mxu0 0.0
        %268 = vmatpush1.msra.mxu0 0.0
        %269 = vmatprep.subr.mxu0 0.0
        %270 = vmatpush1.msra.mxu0 0.0
        %271 = vmatprep.subr.mxu0 0.0
        %272 = vmatpush1.msra.mxu0 0.0
        %273 = vmatprep.subr.mxu0 0.0
        %274 = vmatpush1.msra.mxu0 0.0
        %275 = vmatprep.subr.mxu0 0.0
        %276 = vmatpush1.msra.mxu0 0.0
        %277 = vmatprep.subr.mxu0 0.0
        %278 = vmatpush1.msra.mxu0 0.0
        %279 = vmatprep.subr.mxu0 0.0
        %280 = vmatpush1.msra.mxu0 0.0
        %281 = vmatprep.subr.mxu0 0.0
        %282 = vmatpush1.msra.mxu0 0.0
        %283 = vmatprep.subr.mxu0 0.0
        %284 = vmatpush1.msra.mxu0 0.0
        %285 = vmatprep.subr.mxu0 0.0
        %286 = vmatpush1.msra.mxu0 0.0
        %287 = vmatprep.subr.mxu0 0.0
        %288 = vmatpush1.msra.mxu0 0.0
        %289 = vmatprep.subr.mxu0 0.0
        %290 = vmatpush1.msra.mxu0 0.0
        %291 = vmatprep.subr.mxu0 0.0
        %292 = vmatpush1.msra.mxu0 0.0
        %293 = vmatprep.subr.mxu0 0.0
        %294 = vmatpush1.msra.mxu0 0.0
        %295 = vmatprep.subr.mxu0 0.0
        %296 = vmatpush1.msra.mxu0 0.0
        %297 = vmatprep.subr.mxu0 0.0
        %298 = vmatpush1.msra.mxu0 0.0
        %299 = vmatprep.subr.mxu0 0.0
        %300 = vmatpush1.msra.mxu0 0.0
        %301 = vmatprep.mubr.f32.mxu0 0.0
        %302 = vmatmul.mubr.f32.gmra.mrb[0].mxu0 %v235
        %v303 = vpop.f32.mrb[0].mxu0
        %v304 = vadd.f32 %v218, %v303
        %v305 = vpop.f32.mrb[0].mxu0
        %306 = vdwg.mxu0
        %v307 = vxor.u32 %v304, 2147483648
        %v308 = vmul.f32 %v307, 1.442695
        %v309 = vpow.pop %v308
        %v310 = vadd.f32 %v309, 1.0
        %v311 = vrcp.pop %v310
        %v312 = vmul.f32 1.0, %v311
        %v313 = vlaneseq
        %v314 = vshrl.u32 %v313, 7
        %v315 = vsub.s32 0, %v314
        %v316 = vrot.slane %v312, %v315
        %318 = vbcast.lane.b32.xlu0 %v316, 256
        %v319 = vpop.permute.xlu0 %318
        %s321 = sor.u32 256, 8
        %322 = vbcast.lane.b32.xlu0 %v316, %s321
        %v323 = vpop.permute.xlu0 %322
        %v324 = vmul.f32 %v204, %v319
        %v325 = vmul.f32 %v205, %v319
        %v326 = vmul.f32 %v206, %v323
        %v327 = vmul.f32 %v207, %v323
        %328 = vst [vmem:[%s203] sm:$0xff] %v324
        %329 = vst [vmem:[%s203 + $0x8] sm:$0xff] %v325
        %330 = vst [vmem:[%s203 + $0x10] sm:$0xff] %v326
        %331 = vst [vmem:[%s203 + $0x18] sm:$0xff] %v327
        %s332 = sand.u32 %s97, 1
        %s333 = scalar_lea.sflag [#allocation4], %s332
        %s334 = sand.u32 %s97, 1
        %s335 = smul.addr %s334, 32
        %s336 = scalar_lea.vmem [#allocation7], %s335
        // Predicated region
        $region41: #{tpu_custom_call.1} parent=31 // pred_check
          %p337 = pneg %p107
        $region42: #{tpu_custom_call.1} parent=31 // pred_check_branch
          %339 = sbr.rel (%p337) target = $region44
        $region43: #{tpu_custom_call.1} parent=31 // pred_region
          %s341 = ssub.s32 512, 512
          %342 = vsyncadd %s333, %s341
          %s343 = smul.addr %s21, 4
          %s344 = smul.addr %s343, 128
          %s345 = scalar_lea.hbm %s3, %s344
          %s346 = sshll.u32 %s336, 4
          %s347 = int_to_ptr.vmem [resolvable:$true] %s346
          %352 = dma.vmem_to_hbm [thread:$0]  %s347, 512, %s345, %s333, 256, 256, 16
        $region44: #{tpu_custom_call.1} parent=31 // pred_fallthru
          _
      $region32: #{tpu_custom_call.1} parent=5 // pred_fallthru
        _
      %p353 = scmp.le.s32.totalorder 2, %s16
      // Predicated region
      $region45: #{tpu_custom_call.1} parent=5 // pred_check
        %p354 = pneg %p353
      $region46: #{tpu_custom_call.1} parent=5 // pred_check_branch
        %356 = sbr.rel (%p354) target = $region48
      $region47: #{tpu_custom_call.1} parent=5 // pred_region
        %s357 = ssub.s32 %s16, 2
        // Predicated region
        $region49: #{tpu_custom_call.1} parent=47 // pred_check
          %p358 = pneg %p113
        $region50: #{tpu_custom_call.1} parent=47 // pred_check_branch
          %360 = sbr.rel (%p358) target = $region52
        $region51: #{tpu_custom_call.1} parent=47 // pred_region
          %s361 = sand.u32 %s98, 1
          %s362 = scalar_lea.sflag [#allocation4], %s361
          %s363 = sand.u32 %s98, 1
          %s364 = smul.addr %s363, 32
          %s365 = scalar_lea.vmem [#allocation7], %s364
          %366 = dma.done %s362, 512
        $region52: #{tpu_custom_call.1} parent=47 // pred_fallthru
          _
      $region48: #{tpu_custom_call.1} parent=5 // pred_fallthru
        _
    $region6: #{tpu_custom_call.1} parent=1 // loop_footer
      %s20 = sadd.s32 1, %s16
    $region7: #{tpu_custom_call.1} parent=1 // loop_footer_branch
      %15 = sbr.rel target = $region3
    $region8: #{tpu_custom_call.1} parent=1 // loop_exit
      _
    %367 = vsyncpa [#allocation3], 1
    %s368 = scalar_lea.sflag [#allocation3], 1
    %369 = vsyncpa %s368, 1
    %370 = vsyncpa [#allocation6], 1
    %371 = vsyncpa [#allocation4], 1
    %s372 = scalar_lea.sflag [#allocation4], 1
    %373 = vsyncpa %s372, 1

</llo_original>
